<compile_context>
chip_gen: v7x
topology: tpu7x:2x2x1
jax: 0.10.0
libtpu: 0.0.40
codegen_flags: <defaults>
</compile_context>

<pallas_src>
import math

import jax
import jax.numpy as jnp
from jax.experimental import pallas as pl
from jax.experimental.pallas import tpu as pltpu

LANE = 128  # TPU lane width; Cout is padded up to a multiple of this.


# -----------------------------------------------------------------------------
# Pallas kernel: one (image, H-tile) block of a 3x3 stride-1 "same" convolution.
# -----------------------------------------------------------------------------
def _conv3x3_kernel(x_ref, w_ref, b_ref, o_ref):
    """x_ref : (1, TH+2, W, 3*Cin)  kw-folded, H-halo'd input slab (bf16)
       w_ref : (3, 3*Cin, Cp)       per-row-tap folded weights, Cout padded (bf16)
       b_ref : (1, Cp)              bias, Cout padded (f32)
       o_ref : (1, TH, W, Cp)       output tile (f32, lane-dense: Cp % 128 == 0)
    """
    th, w, cp = o_ref.shape[1], o_ref.shape[2], o_ref.shape[3]
    kf = x_ref.shape[3]
    m = th * w

    # 3 contiguous leading-dim row slices -> 3 accumulated MXU dots (K = 3*Cin).
    acc = jnp.dot(x_ref[0, 0:th, :, :].reshape(m, kf), w_ref[0],
                  preferred_element_type=jnp.float32)
    for di in (1, 2):  # static, unrolled
        acc = acc + jnp.dot(x_ref[0, di:di + th, :, :].reshape(m, kf), w_ref[di],
                            preferred_element_type=jnp.float32)
    acc = acc + b_ref[...]                                    # f32, lane-dense
    o_ref[0] = acc.reshape(th, w, cp).astype(o_ref.dtype)     # unmasked full-lane store


# -----------------------------------------------------------------------------
# Generation-aware sizing helpers
# -----------------------------------------------------------------------------
def _vmem_budget_bytes():
    """~75% of this generation's physical VMEM (128 MiB v5e/v6e, 64 MiB v7x)."""
    try:
        cap = int(pltpu.get_tpu_info().vmem_capacity_bytes)
        return (cap * 3) // 4
    except Exception:
        return 32 * 1024 * 1024  # conservative fallback, safe on all generations


def _pick_tile_h(H, W, kf, cp, budget):
    """Largest divisor TH of H whose double-buffered blocks fit the VMEM budget."""
    w_bytes = 3 * kf * cp * 2 + cp * 4            # folded weights (bf16) + bias (f32)
    headroom = 2 * 1024 * 1024
    for th in range(H, 0, -1):
        if H % th:
            continue
        in_blk = (th + 2) * W * kf * 2            # bf16 input slab
        out_blk = th * W * cp * 4                 # f32 output tile
        acc_blk = th * W * cp * 4                 # f32 accumulator
        if 2 * (in_blk + out_blk + w_bytes) + acc_blk + headroom <= budget:
            return th
    # TODO(synk): if even TH=1 does not fit (enormous W*Cin), the W axis would
    # also need halo tiling; not required at these shapes.
    return 1


# -----------------------------------------------------------------------------
# Wrapper: layout glue + pallas_call
# -----------------------------------------------------------------------------
def conv3x3_same_pallas(x_nhwc, w_hwio, b, *, compute_dtype=jnp.bfloat16,
                        out_dtype=jnp.float32):
    """3x3 stride-1 'same' conv. x: (N,H,W,Cin), w: (3,3,Cin,Cout), b: (Cout,)."""
    N, H, W, Cin = x_nhwc.shape
    kh, kw, _, Cout = w_hwio.shape
    assert (kh, kw) == (3, 3)

    KF = kw * Cin                                   # kw-folded contraction depth
    Cp = ((Cout + LANE - 1) // LANE) * LANE         # lane-dense padded Cout
    budget = _vmem_budget_bytes()
    TH = _pick_tile_h(H, W, KF, Cp, budget)
    S = H // TH

    # ---- wrapper-side layout glue (XLA) -------------------------------------
    # Pad once (halo) and fold the kw taps onto the lane axis (3x bytes, not 9x).
    xp = jnp.pad(x_nhwc, ((0, 0), (1, 1), (1, 1), (0, 0)))            # (N,H+2,W+2,Cin)
    xf = jnp.concatenate([xp[:, :, dj:dj + W, :] for dj in range(kw)],
                         axis=-1).astype(compute_dtype)               # (N,H+2,W,3Cin)
    # Overlapping (TH+2)-row halo slabs, materialized once (2 extra rows/tile),
    # so every grid step owns a distinct, non-resident block.
    xt = jnp.stack([xf[:, s * TH:s * TH + TH + 2] for s in range(S)],
                   axis=1).reshape(N * S, TH + 2, W, KF)

    # Per-row-tap folded weights: (3, 3*Cin, Cout) with row order (dj, cin),
    # padded to Cp lanes so matmul / bias add / store are all lane-dense.
    wmat = w_hwio.reshape(kh, kw * Cin, Cout)
    wmat = jnp.pad(wmat, ((0, 0), (0, 0), (0, Cp - Cout))).astype(compute_dtype)
    bmat = jnp.pad(b, (0, Cp - Cout)).reshape(1, Cp).astype(jnp.float32)

    # TODO(synk): with tiny Cin the input lane dim (3*Cin) is still narrow; a
    # W*Cin lane-fold of the streaming layout would need an in-kernel unfold
    # before the dot, which costs more XLU work than it saves at these sizes.
    out = pl.pallas_call(
        _conv3x3_kernel,
        out_shape=jax.ShapeDtypeStruct((N * S, TH, W, Cp), out_dtype),
        grid=(N * S,),
        in_specs=[
            pl.BlockSpec((1, TH + 2, W, KF), lambda t: (t, 0, 0, 0)),
            pl.BlockSpec((kh, KF, Cp), lambda t: (0, 0, 0)),   # constant -> loaded once
            pl.BlockSpec((1, Cp), lambda t: (0, 0)),           # constant -> loaded once
        ],
        out_specs=pl.BlockSpec((1, TH, W, Cp), lambda t: (t, 0, 0, 0)),
        compiler_params=pltpu.CompilerParams(
            dimension_semantics=("parallel",),   # distinct per-step blocks -> megacore-safe
            vmem_limit_bytes=int(budget),
        ),
    )(xt, wmat, bmat)

    # Un-tile and drop the Cout padding (wrapper-side glue).
    return out.reshape(N, H, W, Cp)[..., :Cout]


# -----------------------------------------------------------------------------
# Parameter construction (deterministic, synthetic) + spectral norm (glue)
# -----------------------------------------------------------------------------
def _spectral_normalize(w_hwio, key, n_power_iterations=1, eps=1e-12):
    """One power iteration, mirroring torch.nn.utils.spectral_norm's weight/sigma."""
    kh, kw, cin, cout = w_hwio.shape
    wm = jnp.transpose(w_hwio, (3, 2, 0, 1)).reshape(cout, cin * kh * kw)
    u = jax.random.normal(key, (cout,), jnp.float32)
    u = u / (jnp.linalg.norm(u) + eps)
    v = None
    for _ in range(n_power_iterations):
        v = wm.T @ u
        v = v / (jnp.linalg.norm(v) + eps)
        u = wm @ v
        u = u / (jnp.linalg.norm(u) + eps)
    sigma = u @ (wm @ v)
    return w_hwio / sigma


def init_conv_block_params(key, channels_in, channels_out):
    k_w, k_b, k_u = jax.random.split(key, 3)
    fan_in = channels_in * 9
    bound = 1.0 / math.sqrt(fan_in)          # ~ PyTorch Conv2d default init range
    w = jax.random.uniform(k_w, (3, 3, channels_in, channels_out), jnp.float32,
                           minval=-bound, maxval=bound)
    b = jax.random.uniform(k_b, (channels_out,), jnp.float32,
                           minval=-bound, maxval=bound)
    # TODO(synk): spectral_norm's persistent power-iteration buffer `u` is
    # re-sampled at init rather than carried as module state.
    w = _spectral_normalize(w, k_u)
    return {"w": w, "b": b}


# -----------------------------------------------------------------------------
# Forward pass (mirrors ConvBlock.forward, NCHW in / NCHW out)
# -----------------------------------------------------------------------------
@jax.jit
def conv_block_forward(x_nchw, params):
    x = jnp.transpose(x_nchw, (0, 2, 3, 1))            # NCHW -> NHWC (glue)
    y = conv3x3_same_pallas(x, params["w"], params["b"])
    return jnp.transpose(y, (0, 3, 1, 2))              # NHWC -> NCHW


# -----------------------------------------------------------------------------
if __name__ == "__main__":
    key = jax.random.PRNGKey(0)
    k_params, k_x = jax.random.split(key)

    # ConvBlock(channels_in=4, channels_out=8), input (N, C, H, W) = (2, 4, 16, 16)
    N, C_IN, H, W = 2, 4, 16, 16
    C_OUT = 8

    params = init_conv_block_params(k_params, C_IN, C_OUT)
    x = jax.random.normal(k_x, (N, C_IN, H, W), jnp.float32)

    y = conv_block_forward(x, params)
    jax.block_until_ready(y)
    assert y.shape == (N, C_OUT, H, W)

    # Reference: same bf16-rounded operands, f32 convolution via XLA.
    ref = jax.lax.conv_general_dilated(
        x.astype(jnp.bfloat16).astype(jnp.float32),
        params["w"].astype(jnp.bfloat16).astype(jnp.float32),
        window_strides=(1, 1), padding="SAME",
        dimension_numbers=("NCHW", "HWIO", "NCHW"),
        precision=jax.lax.Precision.HIGHEST,
    ) + params["b"].reshape(1, -1, 1, 1)
    err = float(jnp.max(jnp.abs(y - ref)))
    assert err < 2e-2, f"max abs error {err}"

    print("KERNEL_OK")
</pallas_src>

<mosaic_0001>
module attributes {stable_mosaic.version = 11 : i64} {
  func.func @_conv3x3_kernel(%arg0: i32, %arg1: memref<1x18x16x12xbf16, #tpu.memory_space<vmem>>, %arg2: memref<3x12x128xbf16, #tpu.memory_space<vmem>>, %arg3: memref<1x128xf32, #tpu.memory_space<vmem>>, %arg4: memref<1x16x16x128xf32, #tpu.memory_space<vmem>>) attributes {dimension_semantics = [#tpu.dimension_semantics<parallel>], iteration_bounds = array<i64: 2>, scalar_prefetch = 0 : i64, scratch_operands = 0 : i64, tpu.core_type = #tpu.core_type<tc>, window_params = [{transform_indices = @transform_0, window_bounds = array<i64: 1, 18, 16, 12>}, {pipeline_mode = #tpu.pipeline_mode<synchronous>, transform_indices = @transform_1, window_bounds = array<i64: 3, 12, 128>}, {pipeline_mode = #tpu.pipeline_mode<synchronous>, transform_indices = @transform_2, window_bounds = array<i64: 1, 128>}, {transform_indices = @transform_3, window_bounds = array<i64: 1, 16, 16, 128>}]} {
    %c0 = arith.constant 0 : index
    %c0_0 = arith.constant 0 : index
    %c0_1 = arith.constant 0 : index
    %c0_2 = arith.constant 0 : index
    %0 = vector.load %arg1[%c0, %c0_0, %c0_1, %c0_2] : memref<1x18x16x12xbf16, #tpu.memory_space<vmem>>, vector<1x16x16x12xbf16>
    %1 = vector.shape_cast %0 : vector<1x16x16x12xbf16> to vector<16x16x12xbf16>
    %2 = vector.shape_cast %1 : vector<16x16x12xbf16> to vector<256x12xbf16>
    %c0_3 = arith.constant 0 : index
    %c0_4 = arith.constant 0 : index
    %c0_5 = arith.constant 0 : index
    %3 = vector.load %arg2[%c0_3, %c0_4, %c0_5] : memref<3x12x128xbf16, #tpu.memory_space<vmem>>, vector<1x12x128xbf16>
    %4 = vector.shape_cast %3 : vector<1x12x128xbf16> to vector<12x128xbf16>
    %cst = arith.constant dense<0.000000e+00> : vector<256x128xf32>
    %5 = tpu.matmul %2, %4, %cst {dimension_numbers = #tpu.dot_dimension_numbers<[1], [0], [0], [1], [0, 0, 1, 1], [], []>} : vector<256x12xbf16>, vector<12x128xbf16>, vector<256x128xf32> -> vector<256x128xf32>
    %c0_6 = arith.constant 0 : index
    %c1 = arith.constant 1 : index
    %c0_7 = arith.constant 0 : index
    %c0_8 = arith.constant 0 : index
    %6 = vector.load %arg1[%c0_6, %c1, %c0_7, %c0_8] : memref<1x18x16x12xbf16, #tpu.memory_space<vmem>>, vector<1x16x16x12xbf16>
    %7 = vector.shape_cast %6 : vector<1x16x16x12xbf16> to vector<16x16x12xbf16>
    %8 = vector.shape_cast %7 : vector<16x16x12xbf16> to vector<256x12xbf16>
    %c1_9 = arith.constant 1 : index
    %c0_10 = arith.constant 0 : index
    %c0_11 = arith.constant 0 : index
    %9 = vector.load %arg2[%c1_9, %c0_10, %c0_11] : memref<3x12x128xbf16, #tpu.memory_space<vmem>>, vector<1x12x128xbf16>
    %10 = vector.shape_cast %9 : vector<1x12x128xbf16> to vector<12x128xbf16>
    %cst_12 = arith.constant dense<0.000000e+00> : vector<256x128xf32>
    %11 = tpu.matmul %8, %10, %cst_12 {dimension_numbers = #tpu.dot_dimension_numbers<[1], [0], [0], [1], [0, 0, 1, 1], [], []>} : vector<256x12xbf16>, vector<12x128xbf16>, vector<256x128xf32> -> vector<256x128xf32>
    %12 = arith.addf %5, %11 : vector<256x128xf32>
    %c0_13 = arith.constant 0 : index
    %c2 = arith.constant 2 : index
    %c0_14 = arith.constant 0 : index
    %c0_15 = arith.constant 0 : index
    %13 = vector.load %arg1[%c0_13, %c2, %c0_14, %c0_15] : memref<1x18x16x12xbf16, #tpu.memory_space<vmem>>, vector<1x16x16x12xbf16>
    %14 = vector.shape_cast %13 : vector<1x16x16x12xbf16> to vector<16x16x12xbf16>
    %15 = vector.shape_cast %14 : vector<16x16x12xbf16> to vector<256x12xbf16>
    %c2_16 = arith.constant 2 : index
    %c0_17 = arith.constant 0 : index
    %c0_18 = arith.constant 0 : index
    %16 = vector.load %arg2[%c2_16, %c0_17, %c0_18] : memref<3x12x128xbf16, #tpu.memory_space<vmem>>, vector<1x12x128xbf16>
    %17 = vector.shape_cast %16 : vector<1x12x128xbf16> to vector<12x128xbf16>
    %cst_19 = arith.constant dense<0.000000e+00> : vector<256x128xf32>
    %18 = tpu.matmul %15, %17, %cst_19 {dimension_numbers = #tpu.dot_dimension_numbers<[1], [0], [0], [1], [0, 0, 1, 1], [], []>} : vector<256x12xbf16>, vector<12x128xbf16>, vector<256x128xf32> -> vector<256x128xf32>
    %19 = arith.addf %12, %18 : vector<256x128xf32>
    %c0_20 = arith.constant 0 : index
    %c0_21 = arith.constant 0 : index
    %20 = vector.load %arg3[%c0_20, %c0_21] : memref<1x128xf32, #tpu.memory_space<vmem>>, vector<1x128xf32>
    %21 = vector.broadcast %20 : vector<1x128xf32> to vector<256x128xf32>
    %22 = arith.addf %19, %21 : vector<256x128xf32>
    %23 = vector.shape_cast %22 : vector<256x128xf32> to vector<16x16x128xf32>
    %c0_22 = arith.constant 0 : index
    %c0_23 = arith.constant 0 : index
    %c0_24 = arith.constant 0 : index
    %c0_25 = arith.constant 0 : index
    %24 = vector.load %arg4[%c0_22, %c0_23, %c0_24, %c0_25] : memref<1x16x16x128xf32, #tpu.memory_space<vmem>>, vector<1x16x16x128xf32>
    %25 = vector.shape_cast %24 : vector<1x16x16x128xf32> to vector<16x16x128xf32>
    %26 = vector.shape_cast %23 : vector<16x16x128xf32> to vector<1x16x16x128xf32>
    tpu.vector_store %arg4[%c0_22, %c0_23, %c0_24, %c0_25], %26 {strides = array<i32>} : memref<1x16x16x128xf32, #tpu.memory_space<vmem>>, vector<1x16x16x128xf32>,
    return
  }
  func.func @transform_0(%arg0: i32) -> (i32, i32, i32, i32) {
    %c0_i32 = arith.constant 0 : i32
    %c0_i32_0 = arith.constant 0 : i32
    %c0_i32_1 = arith.constant 0 : i32
    %c0_i32_2 = arith.constant 0 : i32
    return %arg0, %c0_i32, %c0_i32_0, %c0_i32_1 : i32, i32, i32, i32
  }
  func.func @transform_1(%arg0: i32) -> (i32, i32, i32) {
    %c0_i32 = arith.constant 0 : i32
    %c0_i32_0 = arith.constant 0 : i32
    %c0_i32_1 = arith.constant 0 : i32
    %c0_i32_2 = arith.constant 0 : i32
    return %c0_i32, %c0_i32_0, %c0_i32_1 : i32, i32, i32
  }
  func.func @transform_2(%arg0: i32) -> (i32, i32) {
    %c0_i32 = arith.constant 0 : i32
    %c0_i32_0 = arith.constant 0 : i32
    %c0_i32_1 = arith.constant 0 : i32
    return %c0_i32, %c0_i32_0 : i32, i32
  }
  func.func @transform_3(%arg0: i32) -> (i32, i32, i32, i32) {
    %c0_i32 = arith.constant 0 : i32
    %c0_i32_0 = arith.constant 0 : i32
    %c0_i32_1 = arith.constant 0 : i32
    %c0_i32_2 = arith.constant 0 : i32
    return %arg0, %c0_i32, %c0_i32_0, %c0_i32_1 : i32, i32, i32, i32
  }
}

</mosaic_0001>

<llo_original>
// kernel: conv_block_forward.1
$region0: #{conv_block_forward.1}
  #allocation0 [shape = 'u32[]', space=smem, size = 0x4, offset = 0x4, fixed_abs, tag = 'smem constant byte address 0x4 - core index']
  #allocation1 [shape = 'u32[144,128]{1,0:T(1,128)}', space=vmem, size = 0x12000, scoped, tag = 'internal scratch']
  %s0 = inlined_call_operand.vmem [shape: bf16[2,18,16,12], index: 0, kind: input, shape index: {}]
  %s1 = inlined_call_operand.vmem [shape: bf16[3,12,128], index: 1, kind: input, shape index: {}]
  %s2 = inlined_call_operand.vmem [shape: f32[1,128], index: 2, kind: input, shape index: {}]
  %s3 = inlined_call_operand.vmem [shape: f32[2,16,16,128], index: 3, kind: output, shape index: {}]
  %s4 = sld [smem:[#allocation0]]
  $region45: #{conv_block_forward.1} parent=0
    _
  %s6 = ssub.s32 1, %s4
  %s7 = scalar_select 0, %s6, %s4
  loop: start=0, step=1, limit=4
  $region2: #{conv_block_forward.1} parent=0 // loop_pre_header
    _
  $region3: #{conv_block_forward.1} parent=0 // loop_header
    %s9 = sphi 0, %s13
    %p10 = scmp.ge.s32.totalorder %s9, 4
    %s19 = sphi 0, %s21
    %s22 = sphi 0, %s19
    %s23 = sphi 0, %s22
    %s39 = sphi 0, %s23
    %s43 = sphi 0, %s43
    %s45 = sphi 0, %s43
    %s46 = sphi 0, %s45
    %s60 = sphi 0, %s46
    %s64 = sphi 0, %s64
    %s66 = sphi 0, %s64
    %s67 = sphi 0, %s66
    %s81 = sphi 0, %s67
    %s87 = sphi 0, %s89
    %s90 = sphi 0, %s87
    %s91 = sphi 0, %s90
    %s107 = sphi 0, %s91
  $region4: #{conv_block_forward.1} parent=0 // loop_header_branch
    %12 = sbr.rel (%p10) target = $region8
  $region5: #{conv_block_forward.1} parent=0 // loop_body
    %s14 = ssub.s32 %s9, 1
    %s15 = ssub.s32 %s9, 2
    %s16 = sadd.s32 %s9, 1
    %s17 = ssub.s32 %s9, %s16
    %p18 = scmp.eq.s32.totalorder %s17, 0
    %s20 = sadd.s32 %s19, 1
    %s21 = scalar_select %p18, %s19, %s20
    %p24 = pneg %p18
    %p25 = scmp.eq.s32.totalorder %s9, 1
    %p26 = por %p24, %p25
    %p27 = scmp.ne.s32.totalorder %s19, %s22
    %p28 = scmp.eq.s32.totalorder %s9, 0
    %p29 = por %p27, %p28
    %p30 = scmp.ne.s32.totalorder %s19, %s22
    %p31 = scmp.eq.s32.totalorder %s14, 1
    %p32 = por %p30, %p31
    %p33 = scmp.ne.s32.totalorder %s22, %s23
    %p34 = scmp.eq.s32.totalorder %s14, 0
    %p35 = por %p33, %p34
    %p36 = scmp.ne.s32.totalorder %s22, %s23
    %p37 = scmp.eq.s32.totalorder %s15, 1
    %p38 = por %p36, %p37
    %p40 = scmp.ne.s32.totalorder %s23, %s39
    %p41 = scmp.eq.s32.totalorder %s15, 0
    %p42 = por %p40, %p41
    %s44 = sadd.s32 %s43, 1
    %p47 = scmp.eq.s32.totalorder %s9, 1
    %p48 = scmp.ne.s32.totalorder %s43, %s45
    %p49 = scmp.eq.s32.totalorder %s9, 0
    %p50 = por %p48, %p49
    %p51 = scmp.ne.s32.totalorder %s43, %s45
    %p52 = scmp.eq.s32.totalorder %s14, 1
    %p53 = por %p51, %p52
    %p54 = scmp.ne.s32.totalorder %s45, %s46
    %p55 = scmp.eq.s32.totalorder %s14, 0
    %p56 = por %p54, %p55
    %p57 = scmp.ne.s32.totalorder %s45, %s46
    %p58 = scmp.eq.s32.totalorder %s15, 1
    %p59 = por %p57, %p58
    %p61 = scmp.ne.s32.totalorder %s46, %s60
    %p62 = scmp.eq.s32.totalorder %s15, 0
    %p63 = por %p61, %p62
    %s65 = sadd.s32 %s64, 1
    %p68 = scmp.eq.s32.totalorder %s9, 1
    %p69 = scmp.ne.s32.totalorder %s64, %s66
    %p70 = scmp.eq.s32.totalorder %s9, 0
    %p71 = por %p69, %p70
    %p72 = scmp.ne.s32.totalorder %s64, %s66
    %p73 = scmp.eq.s32.totalorder %s14, 1
    %p74 = por %p72, %p73
    %p75 = scmp.ne.s32.totalorder %s66, %s67
    %p76 = scmp.eq.s32.totalorder %s14, 0
    %p77 = por %p75, %p76
    %p78 = scmp.ne.s32.totalorder %s66, %s67
    %p79 = scmp.eq.s32.totalorder %s15, 1
    %p80 = por %p78, %p79
    %p82 = scmp.ne.s32.totalorder %s67, %s81
    %p83 = scmp.eq.s32.totalorder %s15, 0
    %p84 = por %p82, %p83
    %s85 = ssub.s32 %s9, %s16
    %p86 = scmp.eq.s32.totalorder %s85, 0
    %s88 = sadd.s32 %s87, 1
    %s89 = scalar_select %p86, %s87, %s88
    %p92 = pneg %p86
    %p93 = scmp.eq.s32.totalorder %s9, 1
    %p94 = por %p92, %p93
    %p95 = scmp.ne.s32.totalorder %s87, %s90
    %p96 = scmp.eq.s32.totalorder %s9, 0
    %p97 = por %p95, %p96
    %p98 = scmp.ne.s32.totalorder %s87, %s90
    %p99 = scmp.eq.s32.totalorder %s14, 1
    %p100 = por %p98, %p99
    %p101 = scmp.ne.s32.totalorder %s90, %s91
    %p102 = scmp.eq.s32.totalorder %s14, 0
    %p103 = por %p101, %p102
    %p104 = scmp.ne.s32.totalorder %s90, %s91
    %p105 = scmp.eq.s32.totalorder %s15, 1
    %p106 = por %p104, %p105
    %p108 = scmp.ne.s32.totalorder %s91, %s107
    %p109 = scmp.eq.s32.totalorder %s15, 0
    %p110 = por %p108, %p109
    %p111 = scmp.le.s32.totalorder 1, %s9
    %p112 = scmp.lt.s32.totalorder %s9, 3
    %p113 = pnand %p111, %p112
    %p114 = pneg %p113
    // Predicated region
    $region9: #{conv_block_forward.1} parent=5 // pred_check
      _
    $region10: #{conv_block_forward.1} parent=5 // pred_check_branch
      %116 = sbr.rel (%p113) target = $region12
    $region11: #{conv_block_forward.1} parent=5 // pred_region
      %s117 = ssub.s32 %s9, 1
      // Predicated region
      $region13: #{conv_block_forward.1} parent=11 // pred_check
        %p118 = pneg %p56
      $region14: #{conv_block_forward.1} parent=11 // pred_check_branch
        %120 = sbr.rel (%p118) target = $region16
      $region15: #{conv_block_forward.1} parent=11 // pred_region
        _
      $region16: #{conv_block_forward.1} parent=11 // pred_fallthru
        _
      // Predicated region
      $region17: #{conv_block_forward.1} parent=11 // pred_check
        %p121 = pneg %p77
      $region18: #{conv_block_forward.1} parent=11 // pred_check_branch
        %123 = sbr.rel (%p121) target = $region20
      $region19: #{conv_block_forward.1} parent=11 // pred_region
        _
      $region20: #{conv_block_forward.1} parent=11 // pred_fallthru
        _
    $region12: #{conv_block_forward.1} parent=5 // pred_fallthru
      _
    %p124 = scmp.lt.s32.totalorder %s9, 2
    // Predicated region
    $region21: #{conv_block_forward.1} parent=5 // pred_check
      %p125 = pneg %p124
    $region22: #{conv_block_forward.1} parent=5 // pred_check_branch
      %127 = sbr.rel (%p125) target = $region24
    $region23: #{conv_block_forward.1} parent=5 // pred_region
      // Predicated region
      $region25: #{conv_block_forward.1} parent=23 // pred_check
        %p128 = pneg %p29
      $region26: #{conv_block_forward.1} parent=23 // pred_check_branch
        %130 = sbr.rel (%p128) target = $region28
      $region27: #{conv_block_forward.1} parent=23 // pred_region
        %p131 = scmp.lt.s32.totalorder %s9, 1
        %s132 = scalar_select %p131, %s9, 1
        %s133 = smul.addr %s132, 36
        %s134 = smul.addr %s133, 4
        %s135 = scalar_lea.vmem %s0, %s134
      $region28: #{conv_block_forward.1} parent=23 // pred_fallthru
        _
    $region24: #{conv_block_forward.1} parent=5 // pred_fallthru
      _
    %p136 = scmp.le.s32.totalorder 1, %s9
    %p137 = scmp.lt.s32.totalorder %s9, 3
    %p138 = pnand %p136, %p137
    %p139 = pneg %p138
    // Predicated region
    $region29: #{conv_block_forward.1} parent=5 // pred_check
      _
    $region30: #{conv_block_forward.1} parent=5 // pred_check_branch
      %141 = sbr.rel (%p138) target = $region32
    $region31: #{conv_block_forward.1} parent=5 // pred_region
      %s142 = ssub.s32 %s9, 1
      %p143 = scmp.lt.s32.totalorder %s14, 1
      %s144 = scalar_select %p143, %s14, 1
      %s145 = smul.addr %s144, 36
      %s146 = smul.addr %s145, 4
      %s147 = scalar_lea.vmem %s0, %s146
      %p148 = pneg %p35
      %p149 = pneg %p32
      %p150 = pneg %p56
      %p151 = pneg %p53
      %p152 = pneg %p77
      %p153 = pneg %p74
      %p154 = pneg %p103
      %p155 = pneg %p100
      %p156 = scmp.lt.s32.totalorder %s14, 1
      %s157 = scalar_select %p156, %s14, 1
      %s158 = smul.addr %s157, 32
      %s159 = smul.addr %s158, 8
      %s160 = scalar_lea.vmem %s3, %s159
      %p161 = scmp.lt.s32.totalorder %s14, 1
      %s162 = scalar_select %p161, %s14, 1
      %s163 = smul.addr %s162, 36
      %s164 = smul.addr %s163, 4
      %s165 = scalar_lea.vmem %s0, %s164
      %p166 = scmp.lt.s32.totalorder %s14, 1
      %s167 = scalar_select %p166, %s14, 1
      %s168 = smul.addr %s167, 32
      %s169 = smul.addr %s168, 8
      %s170 = scalar_lea.vmem %s3, %s169
      %v172 = vld [vmem:[%s165] sm:$0xf]
      %v173 = vld [vmem:[%s165 + $0x4] sm:$0xf]
      %v174 = vld [vmem:[%s165 + $0x8] sm:$0xf]
      %v175 = vld [vmem:[%s165 + $0xc] sm:$0xf]
      %v176 = vld [vmem:[%s165 + $0x10] sm:$0xf]
      %v177 = vld [vmem:[%s165 + $0x14] sm:$0xf]
      %v178 = vld [vmem:[%s165 + $0x18] sm:$0xf]
      %v179 = vld [vmem:[%s165 + $0x1c] sm:$0xf]
      %v180 = vld [vmem:[%s165 + $0x20] sm:$0xf]
      %v181 = vld [vmem:[%s165 + $0x24] sm:$0xf]
      %v182 = vld [vmem:[%s165 + $0x28] sm:$0xf]
      %v183 = vld [vmem:[%s165 + $0x2c] sm:$0xf]
      %v184 = vld [vmem:[%s165 + $0x30] sm:$0xf]
      %v185 = vld [vmem:[%s165 + $0x34] sm:$0xf]
      %v186 = vld [vmem:[%s165 + $0x38] sm:$0xf]
      %v187 = vld [vmem:[%s165 + $0x3c] sm:$0xf]
      %v188 = vld [vmem:[%s165 + $0x40] sm:$0xf]
      %v189 = vld [vmem:[%s165 + $0x44] sm:$0xf]
      %v190 = vld [vmem:[%s165 + $0x48] sm:$0xf]
      %v191 = vld [vmem:[%s165 + $0x4c] sm:$0xf]
      %v192 = vld [vmem:[%s165 + $0x50] sm:$0xf]
      %v193 = vld [vmem:[%s165 + $0x54] sm:$0xf]
      %v194 = vld [vmem:[%s165 + $0x58] sm:$0xf]
      %v195 = vld [vmem:[%s165 + $0x5c] sm:$0xf]
      %v196 = vld [vmem:[%s165 + $0x60] sm:$0xf]
      %v197 = vld [vmem:[%s165 + $0x64] sm:$0xf]
      %v198 = vld [vmem:[%s165 + $0x68] sm:$0xf]
      %v199 = vld [vmem:[%s165 + $0x6c] sm:$0xf]
      %v200 = vld [vmem:[%s165 + $0x70] sm:$0xf]
      %v201 = vld [vmem:[%s165 + $0x74] sm:$0xf]
      %v202 = vld [vmem:[%s165 + $0x78] sm:$0xf]
      %v203 = vld [vmem:[%s165 + $0x7c] sm:$0xf]
      %v204 = vld [vmem:[%s1] sm:$0xf]
      %v205 = vld [vmem:[%s1 + $0x4] sm:$0x3]
      %s206 = scalar_lea.vmem %s165, 8
      %v207 = vld [vmem:[%s206] sm:$0xf]
      %v208 = vld [vmem:[%s206 + $0x4] sm:$0xf]
      %v209 = vld [vmem:[%s206 + $0x8] sm:$0xf]
      %v210 = vld [vmem:[%s206 + $0xc] sm:$0xf]
      %v211 = vld [vmem:[%s206 + $0x10] sm:$0xf]
      %v212 = vld [vmem:[%s206 + $0x14] sm:$0xf]
      %v213 = vld [vmem:[%s206 + $0x18] sm:$0xf]
      %v214 = vld [vmem:[%s206 + $0x1c] sm:$0xf]
      %v215 = vld [vmem:[%s206 + $0x20] sm:$0xf]
      %v216 = vld [vmem:[%s206 + $0x24] sm:$0xf]
      %v217 = vld [vmem:[%s206 + $0x28] sm:$0xf]
      %v218 = vld [vmem:[%s206 + $0x2c] sm:$0xf]
      %v219 = vld [vmem:[%s206 + $0x30] sm:$0xf]
      %v220 = vld [vmem:[%s206 + $0x34] sm:$0xf]
      %v221 = vld [vmem:[%s206 + $0x38] sm:$0xf]
      %v222 = vld [vmem:[%s206 + $0x3c] sm:$0xf]
      %v223 = vld [vmem:[%s206 + $0x40] sm:$0xf]
      %v224 = vld [vmem:[%s206 + $0x44] sm:$0xf]
      %v225 = vld [vmem:[%s206 + $0x48] sm:$0xf]
      %v226 = vld [vmem:[%s206 + $0x4c] sm:$0xf]
      %v227 = vld [vmem:[%s206 + $0x50] sm:$0xf]
      %v228 = vld [vmem:[%s206 + $0x54] sm:$0xf]
      %v229 = vld [vmem:[%s206 + $0x58] sm:$0xf]
      %v230 = vld [vmem:[%s206 + $0x5c] sm:$0xf]
      %v231 = vld [vmem:[%s206 + $0x60] sm:$0xf]
      %v232 = vld [vmem:[%s206 + $0x64] sm:$0xf]
      %v233 = vld [vmem:[%s206 + $0x68] sm:$0xf]
      %v234 = vld [vmem:[%s206 + $0x6c] sm:$0xf]
      %v235 = vld [vmem:[%s206 + $0x70] sm:$0xf]
      %v236 = vld [vmem:[%s206 + $0x74] sm:$0xf]
      %v237 = vld [vmem:[%s206 + $0x78] sm:$0xf]
      %v238 = vld [vmem:[%s206 + $0x7c] sm:$0xf]
      %s239 = scalar_lea.vmem %s1, 8
      %v240 = vld [vmem:[%s239] sm:$0xf]
      %v241 = vld [vmem:[%s239 + $0x4] sm:$0x3]
      %v274 = vunpack.c.l.b16 %v207
      %v275 = vunpack.c.l.b16 %v208
      %v276 = vunpack.c.l.b16 %v209
      %v277 = vunpack.c.l.b16 %v210
      %v278 = vunpack.c.l.b16 %v211
      %v279 = vunpack.c.l.b16 %v212
      %v280 = vunpack.c.l.b16 %v213
      %v281 = vunpack.c.l.b16 %v214
      %v282 = vunpack.c.l.b16 %v215
      %v283 = vunpack.c.l.b16 %v216
      %v284 = vunpack.c.l.b16 %v217
      %v285 = vunpack.c.l.b16 %v218
      %v286 = vunpack.c.l.b16 %v219
      %v287 = vunpack.c.l.b16 %v220
      %v288 = vunpack.c.l.b16 %v221
      %v289 = vunpack.c.l.b16 %v222
      %v290 = vunpack.c.l.b16 %v223
      %v291 = vunpack.c.l.b16 %v224
      %v292 = vunpack.c.l.b16 %v225
      %v293 = vunpack.c.l.b16 %v226
      %v294 = vunpack.c.l.b16 %v227
      %v295 = vunpack.c.l.b16 %v228
      %v296 = vunpack.c.l.b16 %v229
      %v297 = vunpack.c.l.b16 %v230
      %v298 = vunpack.c.l.b16 %v231
      %v299 = vunpack.c.l.b16 %v232
      %v300 = vunpack.c.l.b16 %v233
      %v301 = vunpack.c.l.b16 %v234
      %v302 = vunpack.c.l.b16 %v235
      %v303 = vunpack.c.l.b16 %v236
      %v304 = vunpack.c.l.b16 %v237
      %v305 = vunpack.c.l.b16 %v238
      %v306 = vpack.c.b16 %v275, %v274
      %v307 = vpack.c.b16 %v277, %v276
      %v308 = vpack.c.b16 %v279, %v278
      %v309 = vpack.c.b16 %v281, %v280
      %v310 = vpack.c.b16 %v283, %v282
      %v311 = vpack.c.b16 %v285, %v284
      %v312 = vpack.c.b16 %v287, %v286
      %v313 = vpack.c.b16 %v289, %v288
      %v314 = vpack.c.b16 %v291, %v290
      %v315 = vpack.c.b16 %v293, %v292
      %v316 = vpack.c.b16 %v295, %v294
      %v317 = vpack.c.b16 %v297, %v296
      %v318 = vpack.c.b16 %v299, %v298
      %v319 = vpack.c.b16 %v301, %v300
      %v320 = vpack.c.b16 %v303, %v302
      %v321 = vpack.c.b16 %v305, %v304
      %v324 = vunpack.c.l.b16 %v240
      %v325 = vunpack.c.l.b16 %v241
      %v326 = vpack.c.b16 %v325, %v324
      %vm327 = vcmask 97280
      %v329 = vsel %vm327, %v306, 0
      %v332 = vsel %vm327, %v307, 0
      %v335 = vsel %vm327, %v308, 0
      %v338 = vsel %vm327, %v309, 0
      %v341 = vsel %vm327, %v310, 0
      %v344 = vsel %vm327, %v311, 0
      %v347 = vsel %vm327, %v312, 0
      %v350 = vsel %vm327, %v313, 0
      %v353 = vsel %vm327, %v314, 0
      %v356 = vsel %vm327, %v315, 0
      %v359 = vsel %vm327, %v316, 0
      %v362 = vsel %vm327, %v317, 0
      %v365 = vsel %vm327, %v318, 0
      %v368 = vsel %vm327, %v319, 0
      %v371 = vsel %vm327, %v320, 0
      %v374 = vsel %vm327, %v321, 0
      %vm376 = vcmask 1045504
      %v378 = vsel %vm376, %v326, 0
      %380 = vmatprep.subr.bf16.mxu0 0
      %381 = vmatpush1.bf16.msra.mxu0 %v378
      %382 = vmatprep.subr.bf16.mxu0 0
      %383 = vmatpush1.bf16.msra.mxu0 0
      %384 = vmatprep.subr.bf16.mxu0 0
      %385 = vmatpush1.bf16.msra.mxu0 0
      %386 = vmatprep.subr.bf16.mxu0 0
      %387 = vmatpush1.bf16.msra.mxu0 0
      %388 = vmatprep.subr.bf16.mxu0 0
      %389 = vmatpush1.bf16.msra.mxu0 0
      %390 = vmatprep.subr.bf16.mxu0 0
      %391 = vmatpush1.bf16.msra.mxu0 0
      %392 = vmatprep.subr.bf16.mxu0 0
      %393 = vmatpush1.bf16.msra.mxu0 0
      %394 = vmatprep.subr.bf16.mxu0 0
      %395 = vmatpush1.bf16.msra.mxu0 0
      %396 = vmatprep.subr.bf16.mxu0 0
      %397 = vmatpush1.bf16.msra.mxu0 0
      %398 = vmatprep.subr.bf16.mxu0 0
      %399 = vmatpush1.bf16.msra.mxu0 0
      %400 = vmatprep.subr.bf16.mxu0 0
      %401 = vmatpush1.bf16.msra.mxu0 0
      %402 = vmatprep.subr.bf16.mxu0 0
      %403 = vmatpush1.bf16.msra.mxu0 0
      %404 = vmatprep.subr.bf16.mxu0 0
      %405 = vmatpush1.bf16.msra.mxu0 0
      %406 = vmatprep.subr.bf16.mxu0 0
      %407 = vmatpush1.bf16.msra.mxu0 0
      %408 = vmatprep.subr.bf16.mxu0 0
      %409 = vmatpush1.bf16.msra.mxu0 0
      %410 = vmatprep.subr.bf16.mxu0 0
      %411 = vmatpush1.bf16.msra.mxu0 0
      %412 = vmatprep.mubr.bf16.mxu0 0
      %413 = vmatmul.mubr.bf16.gmra.mrb[0].mxu0 %v329
      %v414 = vpop.f32.mrb[0].mxu0
      %v415 = vadd.f32 0.0, %v414
      %v416 = vpop.f32.mrb[0].mxu0
      %v417 = vpop.f32.mrb[0].mxu0
      %v418 = vadd.f32 0.0, %v417
      %v419 = vpop.f32.mrb[0].mxu0
      %420 = vmatprep.mubr.bf16.mxu0 0
      %421 = vmatmul.mubr.bf16.gmra.mrb[0].mxu0 %v332
      %v422 = vpop.f32.mrb[0].mxu0
      %v423 = vadd.f32 0.0, %v422
      %v424 = vpop.f32.mrb[0].mxu0
      %v425 = vpop.f32.mrb[0].mxu0
      %v426 = vadd.f32 0.0, %v425
      %v427 = vpop.f32.mrb[0].mxu0
      %428 = vmatprep.mubr.bf16.mxu0 0
      %429 = vmatmul.mubr.bf16.gmra.mrb[0].mxu0 %v335
      %v430 = vpop.f32.mrb[0].mxu0
      %v431 = vadd.f32 0.0, %v430
      %v432 = vpop.f32.mrb[0].mxu0
      %v433 = vpop.f32.mrb[0].mxu0
      %v434 = vadd.f32 0.0, %v433
      %v435 = vpop.f32.mrb[0].mxu0
      %436 = vmatprep.mubr.bf16.mxu0 0
      %437 = vmatmul.mubr.bf16.gmra.mrb[0].mxu0 %v338
      %v438 = vpop.f32.mrb[0].mxu0
      %v439 = vadd.f32 0.0, %v438
      %v440 = vpop.f32.mrb[0].mxu0
      %v441 = vpop.f32.mrb[0].mxu0
      %v442 = vadd.f32 0.0, %v441
      %v443 = vpop.f32.mrb[0].mxu0
      %444 = vmatprep.mubr.bf16.mxu0 0
      %445 = vmatmul.mubr.bf16.gmra.mrb[0].mxu0 %v341
      %v446 = vpop.f32.mrb[0].mxu0
      %v447 = vadd.f32 0.0, %v446
      %v448 = vpop.f32.mrb[0].mxu0
      %v449 = vpop.f32.mrb[0].mxu0
      %v450 = vadd.f32 0.0, %v449
      %v451 = vpop.f32.mrb[0].mxu0
      %452 = vmatprep.mubr.bf16.mxu0 0
      %453 = vmatmul.mubr.bf16.gmra.mrb[0].mxu0 %v344
      %v454 = vpop.f32.mrb[0].mxu0
      %v455 = vadd.f32 0.0, %v454
      %v456 = vpop.f32.mrb[0].mxu0
      %v457 = vpop.f32.mrb[0].mxu0
      %v458 = vadd.f32 0.0, %v457
      %v459 = vpop.f32.mrb[0].mxu0
      %460 = vmatprep.mubr.bf16.mxu0 0
      %461 = vmatmul.mubr.bf16.gmra.mrb[0].mxu0 %v347
      %v462 = vpop.f32.mrb[0].mxu0
      %v463 = vadd.f32 0.0, %v462
      %v464 = vpop.f32.mrb[0].mxu0
      %v465 = vpop.f32.mrb[0].mxu0
      %v466 = vadd.f32 0.0, %v465
      %v467 = vpop.f32.mrb[0].mxu0
      %468 = vmatprep.mubr.bf16.mxu0 0
      %469 = vmatmul.mubr.bf16.gmra.mrb[0].mxu0 %v350
      %v470 = vpop.f32.mrb[0].mxu0
      %v471 = vadd.f32 0.0, %v470
      %v472 = vpop.f32.mrb[0].mxu0
      %v473 = vpop.f32.mrb[0].mxu0
      %v474 = vadd.f32 0.0, %v473
      %v475 = vpop.f32.mrb[0].mxu0
      %476 = vmatprep.mubr.bf16.mxu0 0
      %477 = vmatmul.mubr.bf16.gmra.mrb[0].mxu0 %v353
      %v478 = vpop.f32.mrb[0].mxu0
      %v479 = vadd.f32 0.0, %v478
      %v480 = vpop.f32.mrb[0].mxu0
      %v481 = vpop.f32.mrb[0].mxu0
      %v482 = vadd.f32 0.0, %v481
      %v483 = vpop.f32.mrb[0].mxu0
      %484 = vmatprep.mubr.bf16.mxu0 0
      %485 = vmatmul.mubr.bf16.gmra.mrb[0].mxu0 %v356
      %v486 = vpop.f32.mrb[0].mxu0
      %v487 = vadd.f32 0.0, %v486
      %v488 = vpop.f32.mrb[0].mxu0
      %v489 = vpop.f32.mrb[0].mxu0
      %v490 = vadd.f32 0.0, %v489
      %v491 = vpop.f32.mrb[0].mxu0
      %492 = vmatprep.mubr.bf16.mxu0 0
      %493 = vmatmul.mubr.bf16.gmra.mrb[0].mxu0 %v359
      %v494 = vpop.f32.mrb[0].mxu0
      %v495 = vadd.f32 0.0, %v494
      %v496 = vpop.f32.mrb[0].mxu0
      %v497 = vpop.f32.mrb[0].mxu0
      %v498 = vadd.f32 0.0, %v497
      %v499 = vpop.f32.mrb[0].mxu0
      %500 = vmatprep.mubr.bf16.mxu0 0
      %501 = vmatmul.mubr.bf16.gmra.mrb[0].mxu0 %v362
      %v502 = vpop.f32.mrb[0].mxu0
      %v503 = vadd.f32 0.0, %v502
      %v504 = vpop.f32.mrb[0].mxu0
      %v505 = vpop.f32.mrb[0].mxu0
      %v506 = vadd.f32 0.0, %v505
      %v507 = vpop.f32.mrb[0].mxu0
      %508 = vmatprep.mubr.bf16.mxu0 0
      %509 = vmatmul.mubr.bf16.gmra.mrb[0].mxu0 %v365
      %v510 = vpop.f32.mrb[0].mxu0
      %v511 = vadd.f32 0.0, %v510
      %v512 = vpop.f32.mrb[0].mxu0
      %v513 = vpop.f32.mrb[0].mxu0
      %v514 = vadd.f32 0.0, %v513
      %v515 = vpop.f32.mrb[0].mxu0
      %516 = vmatprep.mubr.bf16.mxu0 0
      %517 = vmatmul.mubr.bf16.gmra.mrb[0].mxu0 %v368
      %v518 = vpop.f32.mrb[0].mxu0
      %v519 = vadd.f32 0.0, %v518
      %v520 = vpop.f32.mrb[0].mxu0
      %v521 = vpop.f32.mrb[0].mxu0
      %v522 = vadd.f32 0.0, %v521
      %v523 = vpop.f32.mrb[0].mxu0
      %524 = vmatprep.mubr.bf16.mxu0 0
      %525 = vmatmul.mubr.bf16.gmra.mrb[0].mxu0 %v371
      %v526 = vpop.f32.mrb[0].mxu0
      %v527 = vadd.f32 0.0, %v526
      %v528 = vpop.f32.mrb[0].mxu0
      %v529 = vpop.f32.mrb[0].mxu0
      %v530 = vadd.f32 0.0, %v529
      %v531 = vpop.f32.mrb[0].mxu0
      %532 = vmatprep.mubr.bf16.mxu0 0
      %533 = vmatmul.mubr.bf16.gmra.mrb[0].mxu0 %v374
      %v534 = vpop.f32.mrb[0].mxu0
      %v535 = vadd.f32 0.0, %v534
      %v536 = vpop.f32.mrb[0].mxu0
      %v537 = vpop.f32.mrb[0].mxu0
      %v538 = vadd.f32 0.0, %v537
      %v539 = vpop.f32.mrb[0].mxu0
      %540 = vdwg.mxu0
      %v573 = vunpack.c.l.b16 %v172
      %v574 = vunpack.c.l.b16 %v173
      %v575 = vunpack.c.l.b16 %v174
      %v576 = vunpack.c.l.b16 %v175
      %v577 = vunpack.c.l.b16 %v176
      %v578 = vunpack.c.l.b16 %v177
      %v579 = vunpack.c.l.b16 %v178
      %v580 = vunpack.c.l.b16 %v179
      %v581 = vunpack.c.l.b16 %v180
      %v582 = vunpack.c.l.b16 %v181
      %v583 = vunpack.c.l.b16 %v182
      %v584 = vunpack.c.l.b16 %v183
      %v585 = vunpack.c.l.b16 %v184
      %v586 = vunpack.c.l.b16 %v185
      %v587 = vunpack.c.l.b16 %v186
      %v588 = vunpack.c.l.b16 %v187
      %v589 = vunpack.c.l.b16 %v188
      %v590 = vunpack.c.l.b16 %v189
      %v591 = vunpack.c.l.b16 %v190
      %v592 = vunpack.c.l.b16 %v191
      %v593 = vunpack.c.l.b16 %v192
      %v594 = vunpack.c.l.b16 %v193
      %v595 = vunpack.c.l.b16 %v194
      %v596 = vunpack.c.l.b16 %v195
      %v597 = vunpack.c.l.b16 %v196
      %v598 = vunpack.c.l.b16 %v197
      %v599 = vunpack.c.l.b16 %v198
      %v600 = vunpack.c.l.b16 %v199
      %v601 = vunpack.c.l.b16 %v200
      %v602 = vunpack.c.l.b16 %v201
      %v603 = vunpack.c.l.b16 %v202
      %v604 = vunpack.c.l.b16 %v203
      %v605 = vpack.c.b16 %v574, %v573
      %v606 = vpack.c.b16 %v576, %v575
      %v607 = vpack.c.b16 %v578, %v577
      %v608 = vpack.c.b16 %v580, %v579
      %v609 = vpack.c.b16 %v582, %v581
      %v610 = vpack.c.b16 %v584, %v583
      %v611 = vpack.c.b16 %v586, %v585
      %v612 = vpack.c.b16 %v588, %v587
      %v613 = vpack.c.b16 %v590, %v589
      %v614 = vpack.c.b16 %v592, %v591
      %v615 = vpack.c.b16 %v594, %v593
      %v616 = vpack.c.b16 %v596, %v595
      %v617 = vpack.c.b16 %v598, %v597
      %v618 = vpack.c.b16 %v600, %v599
      %v619 = vpack.c.b16 %v602, %v601
      %v620 = vpack.c.b16 %v604, %v603
      %v623 = vunpack.c.l.b16 %v204
      %v624 = vunpack.c.l.b16 %v205
      %v625 = vpack.c.b16 %v624, %v623
      %v627 = vsel %vm327, %v605, 0
      %v630 = vsel %vm327, %v606, 0
      %v633 = vsel %vm327, %v607, 0
      %v636 = vsel %vm327, %v608, 0
      %v639 = vsel %vm327, %v609, 0
      %v642 = vsel %vm327, %v610, 0
      %v645 = vsel %vm327, %v611, 0
      %v648 = vsel %vm327, %v612, 0
      %v651 = vsel %vm327, %v613, 0
      %v654 = vsel %vm327, %v614, 0
      %v657 = vsel %vm327, %v615, 0
      %v660 = vsel %vm327, %v616, 0
      %v663 = vsel %vm327, %v617, 0
      %v666 = vsel %vm327, %v618, 0
      %v669 = vsel %vm327, %v619, 0
      %v672 = vsel %vm327, %v620, 0
      %v675 = vsel %vm376, %v625, 0
      %677 = vmatprep.subr.bf16.mxu0 0
      %678 = vmatpush1.bf16.msra.mxu0 %v675
      %679 = vmatprep.subr.bf16.mxu0 0
      %680 = vmatpush1.bf16.msra.mxu0 0
      %681 = vmatprep.subr.bf16.mxu0 0
      %682 = vmatpush1.bf16.msra.mxu0 0
      %683 = vmatprep.subr.bf16.mxu0 0
      %684 = vmatpush1.bf16.msra.mxu0 0
      %685 = vmatprep.subr.bf16.mxu0 0
      %686 = vmatpush1.bf16.msra.mxu0 0
      %687 = vmatprep.subr.bf16.mxu0 0
      %688 = vmatpush1.bf16.msra.mxu0 0
      %689 = vmatprep.subr.bf16.mxu0 0
      %690 = vmatpush1.bf16.msra.mxu0 0
      %691 = vmatprep.subr.bf16.mxu0 0
      %692 = vmatpush1.bf16.msra.mxu0 0
      %693 = vmatprep.subr.bf16.mxu0 0
      %694 = vmatpush1.bf16.msra.mxu0 0
      %695 = vmatprep.subr.bf16.mxu0 0
      %696 = vmatpush1.bf16.msra.mxu0 0
      %697 = vmatprep.subr.bf16.mxu0 0
      %698 = vmatpush1.bf16.msra.mxu0 0
      %699 = vmatprep.subr.bf16.mxu0 0
      %700 = vmatpush1.bf16.msra.mxu0 0
      %701 = vmatprep.subr.bf16.mxu0 0
      %702 = vmatpush1.bf16.msra.mxu0 0
      %703 = vmatprep.subr.bf16.mxu0 0
      %704 = vmatpush1.bf16.msra.mxu0 0
      %705 = vmatprep.subr.bf16.mxu0 0
      %706 = vmatpush1.bf16.msra.mxu0 0
      %707 = vmatprep.subr.bf16.mxu0 0
      %708 = vmatpush1.bf16.msra.mxu0 0
      %709 = vmatprep.mubr.bf16.mxu0 0
      %710 = vmatmul.mubr.bf16.gmra.mrb[0].mxu0 %v627
      %v711 = vpop.f32.mrb[0].mxu0
      %v712 = vadd.f32 %v415, %v711
      %v713 = vpop.f32.mrb[0].mxu0
      %v714 = vpop.f32.mrb[0].mxu0
      %v715 = vadd.f32 %v418, %v714
      %v716 = vpop.f32.mrb[0].mxu0
      %717 = vmatprep.mubr.bf16.mxu0 0
      %718 = vmatmul.mubr.bf16.gmra.mrb[0].mxu0 %v630
      %v719 = vpop.f32.mrb[0].mxu0
      %v720 = vadd.f32 %v423, %v719
      %v721 = vpop.f32.mrb[0].mxu0
      %v722 = vpop.f32.mrb[0].mxu0
      %v723 = vadd.f32 %v426, %v722
      %v724 = vpop.f32.mrb[0].mxu0
      %725 = vmatprep.mubr.bf16.mxu0 0
      %726 = vmatmul.mubr.bf16.gmra.mrb[0].mxu0 %v633
      %v727 = vpop.f32.mrb[0].mxu0
      %v728 = vadd.f32 %v431, %v727
      %v729 = vpop.f32.mrb[0].mxu0
      %v730 = vpop.f32.mrb[0].mxu0
      %v731 = vadd.f32 %v434, %v730
      %v732 = vpop.f32.mrb[0].mxu0
      %733 = vmatprep.mubr.bf16.mxu0 0
      %734 = vmatmul.mubr.bf16.gmra.mrb[0].mxu0 %v636
      %v735 = vpop.f32.mrb[0].mxu0
      %v736 = vadd.f32 %v439, %v735
      %v737 = vpop.f32.mrb[0].mxu0
      %v738 = vpop.f32.mrb[0].mxu0
      %v739 = vadd.f32 %v442, %v738
      %v740 = vpop.f32.mrb[0].mxu0
      %741 = vmatprep.mubr.bf16.mxu0 0
      %742 = vmatmul.mubr.bf16.gmra.mrb[0].mxu0 %v639
      %v743 = vpop.f32.mrb[0].mxu0
      %v744 = vadd.f32 %v447, %v743
      %v745 = vpop.f32.mrb[0].mxu0
      %v746 = vpop.f32.mrb[0].mxu0
      %v747 = vadd.f32 %v450, %v746
      %v748 = vpop.f32.mrb[0].mxu0
      %749 = vmatprep.mubr.bf16.mxu0 0
      %750 = vmatmul.mubr.bf16.gmra.mrb[0].mxu0 %v642
      %v751 = vpop.f32.mrb[0].mxu0
      %v752 = vadd.f32 %v455, %v751
      %v753 = vpop.f32.mrb[0].mxu0
      %v754 = vpop.f32.mrb[0].mxu0
      %v755 = vadd.f32 %v458, %v754
      %v756 = vpop.f32.mrb[0].mxu0
      %757 = vmatprep.mubr.bf16.mxu0 0
      %758 = vmatmul.mubr.bf16.gmra.mrb[0].mxu0 %v645
      %v759 = vpop.f32.mrb[0].mxu0
      %v760 = vadd.f32 %v463, %v759
      %v761 = vpop.f32.mrb[0].mxu0
      %v762 = vpop.f32.mrb[0].mxu0
      %v763 = vadd.f32 %v466, %v762
      %v764 = vpop.f32.mrb[0].mxu0
      %765 = vmatprep.mubr.bf16.mxu0 0
      %766 = vmatmul.mubr.bf16.gmra.mrb[0].mxu0 %v648
      %v767 = vpop.f32.mrb[0].mxu0
      %v768 = vadd.f32 %v471, %v767
      %v769 = vpop.f32.mrb[0].mxu0
      %v770 = vpop.f32.mrb[0].mxu0
      %v771 = vadd.f32 %v474, %v770
      %v772 = vpop.f32.mrb[0].mxu0
      %773 = vmatprep.mubr.bf16.mxu0 0
      %774 = vmatmul.mubr.bf16.gmra.mrb[0].mxu0 %v651
      %v775 = vpop.f32.mrb[0].mxu0
      %v776 = vadd.f32 %v479, %v775
      %v777 = vpop.f32.mrb[0].mxu0
      %v778 = vpop.f32.mrb[0].mxu0
      %v779 = vadd.f32 %v482, %v778
      %v780 = vpop.f32.mrb[0].mxu0
      %781 = vmatprep.mubr.bf16.mxu0 0
      %782 = vmatmul.mubr.bf16.gmra.mrb[0].mxu0 %v654
      %v783 = vpop.f32.mrb[0].mxu0
      %v784 = vadd.f32 %v487, %v783
      %v785 = vpop.f32.mrb[0].mxu0
      %v786 = vpop.f32.mrb[0].mxu0
      %v787 = vadd.f32 %v490, %v786
      %v788 = vpop.f32.mrb[0].mxu0
      %789 = vmatprep.mubr.bf16.mxu0 0
      %790 = vmatmul.mubr.bf16.gmra.mrb[0].mxu0 %v657
      %v791 = vpop.f32.mrb[0].mxu0
      %v792 = vadd.f32 %v495, %v791
      %v793 = vpop.f32.mrb[0].mxu0
      %v794 = vpop.f32.mrb[0].mxu0
      %v795 = vadd.f32 %v498, %v794
      %v796 = vpop.f32.mrb[0].mxu0
      %797 = vmatprep.mubr.bf16.mxu0 0
      %798 = vmatmul.mubr.bf16.gmra.mrb[0].mxu0 %v660
      %v799 = vpop.f32.mrb[0].mxu0
      %v800 = vadd.f32 %v503, %v799
      %v801 = vpop.f32.mrb[0].mxu0
      %v802 = vpop.f32.mrb[0].mxu0
      %v803 = vadd.f32 %v506, %v802
      %v804 = vpop.f32.mrb[0].mxu0
      %805 = vmatprep.mubr.bf16.mxu0 0
      %806 = vmatmul.mubr.bf16.gmra.mrb[0].mxu0 %v663
      %v807 = vpop.f32.mrb[0].mxu0
      %v808 = vadd.f32 %v511, %v807
      %v809 = vpop.f32.mrb[0].mxu0
      %v810 = vpop.f32.mrb[0].mxu0
      %v811 = vadd.f32 %v514, %v810
      %v812 = vpop.f32.mrb[0].mxu0
      %813 = vmatprep.mubr.bf16.mxu0 0
      %814 = vmatmul.mubr.bf16.gmra.mrb[0].mxu0 %v666
      %v815 = vpop.f32.mrb[0].mxu0
      %v816 = vadd.f32 %v519, %v815
      %v817 = vpop.f32.mrb[0].mxu0
      %v818 = vpop.f32.mrb[0].mxu0
      %v819 = vadd.f32 %v522, %v818
      %v820 = vpop.f32.mrb[0].mxu0
      %821 = vmatprep.mubr.bf16.mxu0 0
      %822 = vmatmul.mubr.bf16.gmra.mrb[0].mxu0 %v669
      %v823 = vpop.f32.mrb[0].mxu0
      %v824 = vadd.f32 %v527, %v823
      %v825 = vpop.f32.mrb[0].mxu0
      %v826 = vpop.f32.mrb[0].mxu0
      %v827 = vadd.f32 %v530, %v826
      %v828 = vpop.f32.mrb[0].mxu0
      %829 = vmatprep.mubr.bf16.mxu0 0
      %830 = vmatmul.mubr.bf16.gmra.mrb[0].mxu0 %v672
      %v831 = vpop.f32.mrb[0].mxu0
      %v832 = vadd.f32 %v535, %v831
      %v833 = vpop.f32.mrb[0].mxu0
      %v834 = vpop.f32.mrb[0].mxu0
      %v835 = vadd.f32 %v538, %v834
      %v836 = vpop.f32.mrb[0].mxu0
      %837 = vdwg.mxu0
      %s838 = scalar_lea.vmem %s165, 16
      %v839 = vld [vmem:[%s838] sm:$0xf]
      %v840 = vld [vmem:[%s838 + $0x4] sm:$0xf]
      %v841 = vld [vmem:[%s838 + $0x8] sm:$0xf]
      %v842 = vld [vmem:[%s838 + $0xc] sm:$0xf]
      %v843 = vld [vmem:[%s838 + $0x10] sm:$0xf]
      %v844 = vld [vmem:[%s838 + $0x14] sm:$0xf]
      %v845 = vld [vmem:[%s838 + $0x18] sm:$0xf]
      %v846 = vld [vmem:[%s838 + $0x1c] sm:$0xf]
      %v847 = vld [vmem:[%s838 + $0x20] sm:$0xf]
      %v848 = vld [vmem:[%s838 + $0x24] sm:$0xf]
      %v849 = vld [vmem:[%s838 + $0x28] sm:$0xf]
      %v850 = vld [vmem:[%s838 + $0x2c] sm:$0xf]
      %v851 = vld [vmem:[%s838 + $0x30] sm:$0xf]
      %v852 = vld [vmem:[%s838 + $0x34] sm:$0xf]
      %v853 = vld [vmem:[%s838 + $0x38] sm:$0xf]
      %v854 = vld [vmem:[%s838 + $0x3c] sm:$0xf]
      %v855 = vld [vmem:[%s838 + $0x40] sm:$0xf]
      %v856 = vld [vmem:[%s838 + $0x44] sm:$0xf]
      %v857 = vld [vmem:[%s838 + $0x48] sm:$0xf]
      %v858 = vld [vmem:[%s838 + $0x4c] sm:$0xf]
      %v859 = vld [vmem:[%s838 + $0x50] sm:$0xf]
      %v860 = vld [vmem:[%s838 + $0x54] sm:$0xf]
      %v861 = vld [vmem:[%s838 + $0x58] sm:$0xf]
      %v862 = vld [vmem:[%s838 + $0x5c] sm:$0xf]
      %v863 = vld [vmem:[%s838 + $0x60] sm:$0xf]
      %v864 = vld [vmem:[%s838 + $0x64] sm:$0xf]
      %v865 = vld [vmem:[%s838 + $0x68] sm:$0xf]
      %v866 = vld [vmem:[%s838 + $0x6c] sm:$0xf]
      %v867 = vld [vmem:[%s838 + $0x70] sm:$0xf]
      %v868 = vld [vmem:[%s838 + $0x74] sm:$0xf]
      %v869 = vld [vmem:[%s838 + $0x78] sm:$0xf]
      %v870 = vld [vmem:[%s838 + $0x7c] sm:$0xf]
      %s871 = scalar_lea.vmem %s1, 16
      %v872 = vld [vmem:[%s871] sm:$0xf]
      %v873 = vld [vmem:[%s871 + $0x4] sm:$0x3]
      %v906 = vunpack.c.l.b16 %v839
      %v907 = vunpack.c.l.b16 %v840
      %v908 = vunpack.c.l.b16 %v841
      %v909 = vunpack.c.l.b16 %v842
      %v910 = vunpack.c.l.b16 %v843
      %v911 = vunpack.c.l.b16 %v844
      %v912 = vunpack.c.l.b16 %v845
      %v913 = vunpack.c.l.b16 %v846
      %v914 = vunpack.c.l.b16 %v847
      %v915 = vunpack.c.l.b16 %v848
      %v916 = vunpack.c.l.b16 %v849
      %v917 = vunpack.c.l.b16 %v850
      %v918 = vunpack.c.l.b16 %v851
      %v919 = vunpack.c.l.b16 %v852
      %v920 = vunpack.c.l.b16 %v853
      %v921 = vunpack.c.l.b16 %v854
      %v922 = vunpack.c.l.b16 %v855
      %v923 = vunpack.c.l.b16 %v856
      %v924 = vunpack.c.l.b16 %v857
      %v925 = vunpack.c.l.b16 %v858
      %v926 = vunpack.c.l.b16 %v859
      %v927 = vunpack.c.l.b16 %v860
      %v928 = vunpack.c.l.b16 %v861
      %v929 = vunpack.c.l.b16 %v862
      %v930 = vunpack.c.l.b16 %v863
      %v931 = vunpack.c.l.b16 %v864
      %v932 = vunpack.c.l.b16 %v865
      %v933 = vunpack.c.l.b16 %v866
      %v934 = vunpack.c.l.b16 %v867
      %v935 = vunpack.c.l.b16 %v868
      %v936 = vunpack.c.l.b16 %v869
      %v937 = vunpack.c.l.b16 %v870
      %v938 = vpack.c.b16 %v907, %v906
      %v939 = vpack.c.b16 %v909, %v908
      %v940 = vpack.c.b16 %v911, %v910
      %v941 = vpack.c.b16 %v913, %v912
      %v942 = vpack.c.b16 %v915, %v914
      %v943 = vpack.c.b16 %v917, %v916
      %v944 = vpack.c.b16 %v919, %v918
      %v945 = vpack.c.b16 %v921, %v920
      %v946 = vpack.c.b16 %v923, %v922
      %v947 = vpack.c.b16 %v925, %v924
      %v948 = vpack.c.b16 %v927, %v926
      %v949 = vpack.c.b16 %v929, %v928
      %v950 = vpack.c.b16 %v931, %v930
      %v951 = vpack.c.b16 %v933, %v932
      %v952 = vpack.c.b16 %v935, %v934
      %v953 = vpack.c.b16 %v937, %v936
      %v956 = vunpack.c.l.b16 %v872
      %v957 = vunpack.c.l.b16 %v873
      %v958 = vpack.c.b16 %v957, %v956
      %v960 = vsel %vm327, %v938, 0
      %v963 = vsel %vm327, %v939, 0
      %v966 = vsel %vm327, %v940, 0
      %v969 = vsel %vm327, %v941, 0
      %v972 = vsel %vm327, %v942, 0
      %v975 = vsel %vm327, %v943, 0
      %v978 = vsel %vm327, %v944, 0
      %v981 = vsel %vm327, %v945, 0
      %v984 = vsel %vm327, %v946, 0
      %v987 = vsel %vm327, %v947, 0
      %v990 = vsel %vm327, %v948, 0
      %v993 = vsel %vm327, %v949, 0
      %v996 = vsel %vm327, %v950, 0
      %v999 = vsel %vm327, %v951, 0
      %v1002 = vsel %vm327, %v952, 0
      %v1005 = vsel %vm327, %v953, 0
      %v1008 = vsel %vm376, %v958, 0
      %1010 = vmatprep.subr.bf16.mxu0 0
      %1011 = vmatpush1.bf16.msra.mxu0 %v1008
      %1012 = vmatprep.subr.bf16.mxu0 0
      %1013 = vmatpush1.bf16.msra.mxu0 0
      %1014 = vmatprep.subr.bf16.mxu0 0
      %1015 = vmatpush1.bf16.msra.mxu0 0
      %1016 = vmatprep.subr.bf16.mxu0 0
      %1017 = vmatpush1.bf16.msra.mxu0 0
      %1018 = vmatprep.subr.bf16.mxu0 0
      %1019 = vmatpush1.bf16.msra.mxu0 0
      %1020 = vmatprep.subr.bf16.mxu0 0
      %1021 = vmatpush1.bf16.msra.mxu0 0
      %1022 = vmatprep.subr.bf16.mxu0 0
      %1023 = vmatpush1.bf16.msra.mxu0 0
      %1024 = vmatprep.subr.bf16.mxu0 0
      %1025 = vmatpush1.bf16.msra.mxu0 0
      %1026 = vmatprep.subr.bf16.mxu0 0
      %1027 = vmatpush1.bf16.msra.mxu0 0
      %1028 = vmatprep.subr.bf16.mxu0 0
      %1029 = vmatpush1.bf16.msra.mxu0 0
      %1030 = vmatprep.subr.bf16.mxu0 0
      %1031 = vmatpush1.bf16.msra.mxu0 0
      %1032 = vmatprep.subr.bf16.mxu0 0
      %1033 = vmatpush1.bf16.msra.mxu0 0
      %1034 = vmatprep.subr.bf16.mxu0 0
      %1035 = vmatpush1.bf16.msra.mxu0 0
      %1036 = vmatprep.subr.bf16.mxu0 0
      %1037 = vmatpush1.bf16.msra.mxu0 0
      %1038 = vmatprep.subr.bf16.mxu0 0
      %1039 = vmatpush1.bf16.msra.mxu0 0
      %1040 = vmatprep.subr.bf16.mxu0 0
      %1041 = vmatpush1.bf16.msra.mxu0 0
      %1042 = vmatprep.mubr.bf16.mxu0 0
      %1043 = vmatmul.mubr.bf16.gmra.mrb[0].mxu0 %v960
      %v1044 = vpop.f32.mrb[0].mxu0
      %v1045 = vadd.f32 0.0, %v1044
      %v1046 = vpop.f32.mrb[0].mxu0
      %v1047 = vpop.f32.mrb[0].mxu0
      %v1048 = vadd.f32 0.0, %v1047
      %v1049 = vpop.f32.mrb[0].mxu0
      %1050 = vmatprep.mubr.bf16.mxu0 0
      %1051 = vmatmul.mubr.bf16.gmra.mrb[0].mxu0 %v963
      %v1052 = vpop.f32.mrb[0].mxu0
      %v1053 = vadd.f32 0.0, %v1052
      %v1054 = vpop.f32.mrb[0].mxu0
      %v1055 = vpop.f32.mrb[0].mxu0
      %v1056 = vadd.f32 0.0, %v1055
      %v1057 = vpop.f32.mrb[0].mxu0
      %1058 = vmatprep.mubr.bf16.mxu0 0
      %1059 = vmatmul.mubr.bf16.gmra.mrb[0].mxu0 %v966
      %v1060 = vpop.f32.mrb[0].mxu0
      %v1061 = vadd.f32 0.0, %v1060
      %v1062 = vpop.f32.mrb[0].mxu0
      %v1063 = vpop.f32.mrb[0].mxu0
      %v1064 = vadd.f32 0.0, %v1063
      %v1065 = vpop.f32.mrb[0].mxu0
      %1066 = vmatprep.mubr.bf16.mxu0 0
      %1067 = vmatmul.mubr.bf16.gmra.mrb[0].mxu0 %v969
      %v1068 = vpop.f32.mrb[0].mxu0
      %v1069 = vadd.f32 0.0, %v1068
      %v1070 = vpop.f32.mrb[0].mxu0
      %v1071 = vpop.f32.mrb[0].mxu0
      %v1072 = vadd.f32 0.0, %v1071
      %v1073 = vpop.f32.mrb[0].mxu0
      %1074 = vmatprep.mubr.bf16.mxu0 0
      %1075 = vmatmul.mubr.bf16.gmra.mrb[0].mxu0 %v972
      %v1076 = vpop.f32.mrb[0].mxu0
      %v1077 = vadd.f32 0.0, %v1076
      %v1078 = vpop.f32.mrb[0].mxu0
      %v1079 = vpop.f32.mrb[0].mxu0
      %v1080 = vadd.f32 0.0, %v1079
      %v1081 = vpop.f32.mrb[0].mxu0
      %1082 = vmatprep.mubr.bf16.mxu0 0
      %1083 = vmatmul.mubr.bf16.gmra.mrb[0].mxu0 %v975
      %v1084 = vpop.f32.mrb[0].mxu0
      %v1085 = vadd.f32 0.0, %v1084
      %v1086 = vpop.f32.mrb[0].mxu0
      %v1087 = vpop.f32.mrb[0].mxu0
      %v1088 = vadd.f32 0.0, %v1087
      %v1089 = vpop.f32.mrb[0].mxu0
      %1090 = vmatprep.mubr.bf16.mxu0 0
      %1091 = vmatmul.mubr.bf16.gmra.mrb[0].mxu0 %v978
      %v1092 = vpop.f32.mrb[0].mxu0
      %v1093 = vadd.f32 0.0, %v1092
      %v1094 = vpop.f32.mrb[0].mxu0
      %v1095 = vpop.f32.mrb[0].mxu0
      %v1096 = vadd.f32 0.0, %v1095
      %v1097 = vpop.f32.mrb[0].mxu0
      %1098 = vmatprep.mubr.bf16.mxu0 0
      %1099 = vmatmul.mubr.bf16.gmra.mrb[0].mxu0 %v981
      %v1100 = vpop.f32.mrb[0].mxu0
      %v1101 = vadd.f32 0.0, %v1100
      %v1102 = vpop.f32.mrb[0].mxu0
      %v1103 = vpop.f32.mrb[0].mxu0
      %v1104 = vadd.f32 0.0, %v1103
      %v1105 = vpop.f32.mrb[0].mxu0
      %1106 = vmatprep.mubr.bf16.mxu0 0
      %1107 = vmatmul.mubr.bf16.gmra.mrb[0].mxu0 %v984
      %v1108 = vpop.f32.mrb[0].mxu0
      %v1109 = vadd.f32 0.0, %v1108
      %v1110 = vpop.f32.mrb[0].mxu0
      %v1111 = vpop.f32.mrb[0].mxu0
      %v1112 = vadd.f32 0.0, %v1111
      %v1113 = vpop.f32.mrb[0].mxu0
      %1114 = vmatprep.mubr.bf16.mxu0 0
      %1115 = vmatmul.mubr.bf16.gmra.mrb[0].mxu0 %v987
      %v1116 = vpop.f32.mrb[0].mxu0
      %v1117 = vadd.f32 0.0, %v1116
      %v1118 = vpop.f32.mrb[0].mxu0
      %v1119 = vpop.f32.mrb[0].mxu0
      %v1120 = vadd.f32 0.0, %v1119
      %v1121 = vpop.f32.mrb[0].mxu0
      %1122 = vmatprep.mubr.bf16.mxu0 0
      %1123 = vmatmul.mubr.bf16.gmra.mrb[0].mxu0 %v990
      %v1124 = vpop.f32.mrb[0].mxu0
      %v1125 = vadd.f32 0.0, %v1124
      %v1126 = vpop.f32.mrb[0].mxu0
      %v1127 = vpop.f32.mrb[0].mxu0
      %v1128 = vadd.f32 0.0, %v1127
      %v1129 = vpop.f32.mrb[0].mxu0
      %1130 = vmatprep.mubr.bf16.mxu0 0
      %1131 = vmatmul.mubr.bf16.gmra.mrb[0].mxu0 %v993
      %v1132 = vpop.f32.mrb[0].mxu0
      %v1133 = vadd.f32 0.0, %v1132
      %v1134 = vpop.f32.mrb[0].mxu0
      %v1135 = vpop.f32.mrb[0].mxu0
      %v1136 = vadd.f32 0.0, %v1135
      %v1137 = vpop.f32.mrb[0].mxu0
      %1138 = vmatprep.mubr.bf16.mxu0 0
      %1139 = vmatmul.mubr.bf16.gmra.mrb[0].mxu0 %v996
      %v1140 = vpop.f32.mrb[0].mxu0
      %v1141 = vadd.f32 0.0, %v1140
      %v1142 = vpop.f32.mrb[0].mxu0
      %v1143 = vpop.f32.mrb[0].mxu0
      %v1144 = vadd.f32 0.0, %v1143
      %v1145 = vpop.f32.mrb[0].mxu0
      %1146 = vmatprep.mubr.bf16.mxu0 0
      %1147 = vmatmul.mubr.bf16.gmra.mrb[0].mxu0 %v999
      %v1148 = vpop.f32.mrb[0].mxu0
      %v1149 = vadd.f32 0.0, %v1148
      %v1150 = vpop.f32.mrb[0].mxu0
      %v1151 = vpop.f32.mrb[0].mxu0
      %v1152 = vadd.f32 0.0, %v1151
      %v1153 = vpop.f32.mrb[0].mxu0
      %1154 = vmatprep.mubr.bf16.mxu0 0
      %1155 = vmatmul.mubr.bf16.gmra.mrb[0].mxu0 %v1002
      %v1156 = vpop.f32.mrb[0].mxu0
      %v1157 = vadd.f32 0.0, %v1156
      %v1158 = vpop.f32.mrb[0].mxu0
      %v1159 = vpop.f32.mrb[0].mxu0
      %v1160 = vadd.f32 0.0, %v1159
      %v1161 = vpop.f32.mrb[0].mxu0
      %1162 = vmatprep.mubr.bf16.mxu0 0
      %1163 = vmatmul.mubr.bf16.gmra.mrb[0].mxu0 %v1005
      %v1164 = vpop.f32.mrb[0].mxu0
      %v1165 = vadd.f32 0.0, %v1164
      %v1166 = vpop.f32.mrb[0].mxu0
      %v1167 = vpop.f32.mrb[0].mxu0
      %v1168 = vadd.f32 0.0, %v1167
      %v1169 = vpop.f32.mrb[0].mxu0
      %1170 = vdwg.mxu0
      %v1171 = vadd.f32 %v712, %v1045
      %v1172 = vadd.f32 %v715, %v1048
      %v1173 = vadd.f32 %v720, %v1053
      %v1174 = vadd.f32 %v723, %v1056
      %v1175 = vadd.f32 %v728, %v1061
      %v1176 = vadd.f32 %v731, %v1064
      %v1177 = vadd.f32 %v736, %v1069
      %v1178 = vadd.f32 %v739, %v1072
      %v1179 = vadd.f32 %v744, %v1077
      %v1180 = vadd.f32 %v747, %v1080
      %v1181 = vadd.f32 %v752, %v1085
      %v1182 = vadd.f32 %v755, %v1088
      %v1183 = vadd.f32 %v760, %v1093
      %v1184 = vadd.f32 %v763, %v1096
      %v1185 = vadd.f32 %v768, %v1101
      %v1186 = vadd.f32 %v771, %v1104
      %v1187 = vadd.f32 %v776, %v1109
      %v1188 = vadd.f32 %v779, %v1112
      %v1189 = vadd.f32 %v784, %v1117
      %v1190 = vadd.f32 %v787, %v1120
      %v1191 = vadd.f32 %v792, %v1125
      %v1192 = vadd.f32 %v795, %v1128
      %v1193 = vadd.f32 %v800, %v1133
      %v1194 = vadd.f32 %v803, %v1136
      %v1195 = vadd.f32 %v808, %v1141
      %v1196 = vadd.f32 %v811, %v1144
      %v1197 = vadd.f32 %v816, %v1149
      %v1198 = vadd.f32 %v819, %v1152
      %v1199 = vadd.f32 %v824, %v1157
      %v1200 = vadd.f32 %v827, %v1160
      %v1201 = vadd.f32 %v832, %v1165
      %v1202 = vadd.f32 %v835, %v1168
      %v1203 = vld [vmem:[%s2] sm:$0x1]
      %v1205 = vlaneseq
      %v1206 = vshrl.u32 %v1205, 7
      %v1207 = vsub.s32 0, %v1206
      %v1208 = vrot.slane %v1203, %v1207
      %v1210 = vadd.f32 %v1171, %v1208
      %v1211 = vadd.f32 %v1172, %v1208
      %v1212 = vadd.f32 %v1173, %v1208
      %v1213 = vadd.f32 %v1174, %v1208
      %v1214 = vadd.f32 %v1175, %v1208
      %v1215 = vadd.f32 %v1176, %v1208
      %v1216 = vadd.f32 %v1177, %v1208
      %v1217 = vadd.f32 %v1178, %v1208
      %v1218 = vadd.f32 %v1179, %v1208
      %v1219 = vadd.f32 %v1180, %v1208
      %v1220 = vadd.f32 %v1181, %v1208
      %v1221 = vadd.f32 %v1182, %v1208
      %v1222 = vadd.f32 %v1183, %v1208
      %v1223 = vadd.f32 %v1184, %v1208
      %v1224 = vadd.f32 %v1185, %v1208
      %v1225 = vadd.f32 %v1186, %v1208
      %v1226 = vadd.f32 %v1187, %v1208
      %v1227 = vadd.f32 %v1188, %v1208
      %v1228 = vadd.f32 %v1189, %v1208
      %v1229 = vadd.f32 %v1190, %v1208
      %v1230 = vadd.f32 %v1191, %v1208
      %v1231 = vadd.f32 %v1192, %v1208
      %v1232 = vadd.f32 %v1193, %v1208
      %v1233 = vadd.f32 %v1194, %v1208
      %v1234 = vadd.f32 %v1195, %v1208
      %v1235 = vadd.f32 %v1196, %v1208
      %v1236 = vadd.f32 %v1197, %v1208
      %v1237 = vadd.f32 %v1198, %v1208
      %v1238 = vadd.f32 %v1199, %v1208
      %v1239 = vadd.f32 %v1200, %v1208
      %v1240 = vadd.f32 %v1201, %v1208
      %v1241 = vadd.f32 %v1202, %v1208
      %1242 = vst [vmem:[%s170] sm:$0xff] %v1210
      %1243 = vst [vmem:[%s170 + $0x8] sm:$0xff] %v1211
      %1244 = vst [vmem:[%s170 + $0x10] sm:$0xff] %v1212
      %1245 = vst [vmem:[%s170 + $0x18] sm:$0xff] %v1213
      %1246 = vst [vmem:[%s170 + $0x20] sm:$0xff] %v1214
      %1247 = vst [vmem:[%s170 + $0x28] sm:$0xff] %v1215
      %1248 = vst [vmem:[%s170 + $0x30] sm:$0xff] %v1216
      %1249 = vst [vmem:[%s170 + $0x38] sm:$0xff] %v1217
      %1250 = vst [vmem:[%s170 + $0x40] sm:$0xff] %v1218
      %1251 = vst [vmem:[%s170 + $0x48] sm:$0xff] %v1219
      %1252 = vst [vmem:[%s170 + $0x50] sm:$0xff] %v1220
      %1253 = vst [vmem:[%s170 + $0x58] sm:$0xff] %v1221
      %1254 = vst [vmem:[%s170 + $0x60] sm:$0xff] %v1222
      %1255 = vst [vmem:[%s170 + $0x68] sm:$0xff] %v1223
      %1256 = vst [vmem:[%s170 + $0x70] sm:$0xff] %v1224
      %1257 = vst [vmem:[%s170 + $0x78] sm:$0xff] %v1225
      %1258 = vst [vmem:[%s170 + $0x80] sm:$0xff] %v1226
      %1259 = vst [vmem:[%s170 + $0x88] sm:$0xff] %v1227
      %1260 = vst [vmem:[%s170 + $0x90] sm:$0xff] %v1228
      %1261 = vst [vmem:[%s170 + $0x98] sm:$0xff] %v1229
      %1262 = vst [vmem:[%s170 + $0xa0] sm:$0xff] %v1230
      %1263 = vst [vmem:[%s170 + $0xa8] sm:$0xff] %v1231
      %1264 = vst [vmem:[%s170 + $0xb0] sm:$0xff] %v1232
      %1265 = vst [vmem:[%s170 + $0xb8] sm:$0xff] %v1233
      %1266 = vst [vmem:[%s170 + $0xc0] sm:$0xff] %v1234
      %1267 = vst [vmem:[%s170 + $0xc8] sm:$0xff] %v1235
      %1268 = vst [vmem:[%s170 + $0xd0] sm:$0xff] %v1236
      %1269 = vst [vmem:[%s170 + $0xd8] sm:$0xff] %v1237
      %1270 = vst [vmem:[%s170 + $0xe0] sm:$0xff] %v1238
      %1271 = vst [vmem:[%s170 + $0xe8] sm:$0xff] %v1239
      %1272 = vst [vmem:[%s170 + $0xf0] sm:$0xff] %v1240
      %1273 = vst [vmem:[%s170 + $0xf8] sm:$0xff] %v1241
      %p1274 = scmp.lt.s32.totalorder %s14, 1
      %s1275 = scalar_select %p1274, %s14, 1
      %s1276 = smul.addr %s1275, 32
      %s1277 = smul.addr %s1276, 8
      %s1278 = scalar_lea.vmem %s3, %s1277
      // Predicated region
      $region33: #{conv_block_forward.1} parent=31 // pred_check
        %p1279 = pneg %p100
      $region34: #{conv_block_forward.1} parent=31 // pred_check_branch
        %1281 = sbr.rel (%p1279) target = $region36
      $region35: #{conv_block_forward.1} parent=31 // pred_region
        _
      $region36: #{conv_block_forward.1} parent=31 // pred_fallthru
        _
    $region32: #{conv_block_forward.1} parent=5 // pred_fallthru
      _
    %p1282 = scmp.le.s32.totalorder 2, %s9
    // Predicated region
    $region37: #{conv_block_forward.1} parent=5 // pred_check
      %p1283 = pneg %p1282
    $region38: #{conv_block_forward.1} parent=5 // pred_check_branch
      %1285 = sbr.rel (%p1283) target = $region40
    $region39: #{conv_block_forward.1} parent=5 // pred_region
      %s1286 = ssub.s32 %s9, 2
      // Predicated region
      $region41: #{conv_block_forward.1} parent=39 // pred_check
        %p1287 = pneg %p106
      $region42: #{conv_block_forward.1} parent=39 // pred_check_branch
        %1289 = sbr.rel (%p1287) target = $region44
      $region43: #{conv_block_forward.1} parent=39 // pred_region
        %p1290 = scmp.lt.s32.totalorder %s15, 1
        %s1291 = scalar_select %p1290, %s15, 1
        %s1292 = smul.addr %s1291, 32
        %s1293 = smul.addr %s1292, 8
        %s1294 = scalar_lea.vmem %s3, %s1293
      $region44: #{conv_block_forward.1} parent=39 // pred_fallthru
        _
    $region40: #{conv_block_forward.1} parent=5 // pred_fallthru
      _
  $region6: #{conv_block_forward.1} parent=0 // loop_footer
    %s13 = sadd.s32 1, %s9
  $region7: #{conv_block_forward.1} parent=0 // loop_footer_branch
    %8 = sbr.rel target = $region3
  $region8: #{conv_block_forward.1} parent=0 // loop_exit
    _

</llo_original>
